<compile_context>
chip_gen: v7x
topology: tpu7x:2x2x1
jax: 0.10.0
libtpu: 0.0.40
codegen_flags: <defaults>
</compile_context>

<pallas_src>
import functools

import jax
import jax.numpy as jnp
from jax.experimental import pallas as pl
from jax.experimental.pallas import tpu as pltpu

EPS = 1e-5
_FALLBACK_VMEM_CAP = 64 * 1024 * 1024  # v7x-safe fallback if get_tpu_info is unavailable


def _vmem_budget_bytes():
    """~75% of physical VMEM: ~48 MiB on v7x, ~96 MiB on v5e/v6e."""
    cap = _FALLBACK_VMEM_CAP
    try:
        info = pltpu.get_tpu_info()
        cap = int(info.vmem_capacity_bytes)
    except Exception:
        pass
    if cap <= 0:
        cap = _FALLBACK_VMEM_CAP
    return (cap * 3) // 4


# --------------------------------------------------------------------------------------
# Kernels
# --------------------------------------------------------------------------------------
def _fused_kernel(x_ref, w_ref, p_ref, g_ref, b_ref, o_ref, *, inv_count):
    """Single-pass path: y = X_fold @ W_blk; per-channel mean/var (lane-fold via a tiny
    matmul against the fold/broadcast matrix P); fused BN affine; write O."""
    y = jnp.dot(x_ref[...].astype(jnp.float32), w_ref[...],
                preferred_element_type=jnp.float32,
                precision=jax.lax.Precision.DEFAULT)
    s = jnp.sum(y, axis=0, keepdims=True)          # (1, L) per-lane sum
    q = jnp.sum(y * y, axis=0, keepdims=True)      # (1, L) per-lane sum of squares
    lanes = y.shape[1]
    r8 = jax.lax.broadcasted_iota(jnp.int32, (8, lanes), 0)
    slab = jnp.where(r8 == 0, jnp.broadcast_to(s, (8, lanes)),
                     jnp.where(r8 == 1, jnp.broadcast_to(q, (8, lanes)), 0.0))
    # Fold the F lane-groups of each channel and broadcast back to all L lanes:
    # tot[r, l] = sum_{l' : l' % C == l % C} slab[r, l']
    tot = jnp.dot(slab, p_ref[...], preferred_element_type=jnp.float32,
                  precision=jax.lax.Precision.DEFAULT)          # (8, L)
    mean = tot[0:1, :] * inv_count                               # (1, L)
    # TODO(synk): E[y^2]-E[y]^2 loses precision if |mean| >> std; use centered sums then.
    var = jnp.maximum(tot[1:2, :] * inv_count - mean * mean, 0.0)
    scale = g_ref[...] * jax.lax.rsqrt(var + EPS)                # (1, L)
    shift = b_ref[...] - mean * scale                            # (1, L)
    o_ref[...] = (y * scale + shift).astype(o_ref.dtype)


def _stats_kernel(x_ref, w_ref, stat_ref, *, n_rows, tile):
    """Streaming pass 1: per row-tile partial per-lane sum (slab row 0) and sum-of-squares
    (slab row 1) of y = X_fold @ W_blk.  Rows >= n_rows (padded last cdiv tile) are masked."""
    i = pl.program_id(0)
    y = jnp.dot(x_ref[...].astype(jnp.float32), w_ref[...],
                preferred_element_type=jnp.float32,
                precision=jax.lax.Precision.DEFAULT)
    rows = jax.lax.broadcasted_iota(jnp.int32, y.shape, 0) + i * tile
    y = jnp.where(rows < n_rows, y, 0.0)
    s = jnp.sum(y, axis=0, keepdims=True)
    q = jnp.sum(y * y, axis=0, keepdims=True)
    lanes = y.shape[1]
    r8 = jax.lax.broadcasted_iota(jnp.int32, (8, lanes), 0)
    slab = jnp.where(r8 == 0, jnp.broadcast_to(s, (8, lanes)),
                     jnp.where(r8 == 1, jnp.broadcast_to(q, (8, lanes)), 0.0))
    stat_ref[...] = slab[None, :, :]


def _apply_kernel(x_ref, w_ref, scale_ref, shift_ref, o_ref):
    """Streaming pass 2: O = (X_fold @ W_blk) * scale + shift  (conv + BN fused affine)."""
    y = jnp.dot(x_ref[...].astype(jnp.float32), w_ref[...],
                preferred_element_type=jnp.float32,
                precision=jax.lax.Precision.DEFAULT)
    o_ref[...] = (y * scale_ref[...] + shift_ref[...]).astype(o_ref.dtype)


# --------------------------------------------------------------------------------------
# Wrapper
# --------------------------------------------------------------------------------------
def cb11_forward(x, H, W, weight, bias, gamma, beta, *, tile_rows=4096,
                 force_two_pass=False):
    """x: (B, N, C) with N == H*W.  Returns (B, N, C), matching CB11.forward (BN train)."""
    del bias  # cancels exactly under train-mode BN mean subtraction; see header.
    B, N, C = x.shape
    assert N == H * W
    M = B * N
    f32 = jnp.float32

    # Fold F consecutive rows into the lane dim so the last dim is 128 lanes.
    F = 128 // C if (C <= 128 and 128 % C == 0) else 1
    # TODO(synk): when C does not divide 128 (F == 1, L == C) stores are lane-masked;
    # channel padding would recover full lane density.
    L = F * C

    x_flat = x.reshape(M, C)
    M_pad = ((M + F - 1) // F) * F
    if M_pad != M:
        # Zero rows contribute 0 to sum/sumsq of y = x @ W^T (bias dropped) and we
        # normalize by the true M, so zero padding is exact for the statistics.
        x_flat = jnp.pad(x_flat, ((0, M_pad - M), (0, 0)))
    MF = M_pad // F
    x2 = x_flat.reshape(MF, L)                    # native dtype: no f32 upcast copy in HBM

    wt = weight.reshape(C, C).T.astype(f32)       # (C_in, C_out), pre-transposed
    w_blk = jnp.kron(jnp.eye(F, dtype=f32), wt)   # (L, L) block-diagonal weight
    gamma_l = jnp.tile(gamma.astype(f32), F).reshape(1, L)
    beta_l = jnp.tile(beta.astype(f32), F).reshape(1, L)

    inv_count = 1.0 / float(M)
    xb = x2.dtype.itemsize
    ob = jnp.dtype(x.dtype).itemsize
    budget = _vmem_budget_bytes()

    # --------------------------- single-pass VMEM-resident fast path -------------------
    fused_est = MF * L * (2 * xb + 2 * ob + 12) + 4 * L * L * 4 + (2 << 20)
    use_fused = (not force_two_pass) and (MF <= 8192) and (fused_est <= budget)

    if use_fused:
        lane = jnp.arange(L, dtype=jnp.int32)
        fold_p = (lane[:, None] % C == lane[None, :] % C).astype(f32)   # (L, L)
        out = pl.pallas_call(
            functools.partial(_fused_kernel, inv_count=inv_count),
            out_shape=jax.ShapeDtypeStruct((MF, L), x.dtype),
            grid_spec=pltpu.PrefetchScalarGridSpec(
                num_scalar_prefetch=0,
                grid=(1,),
                in_specs=[
                    pl.BlockSpec((MF, L), lambda i: (0, 0)),   # X (whole, native dtype)
                    pl.BlockSpec((L, L), lambda i: (0, 0)),    # block-diag weight
                    pl.BlockSpec((L, L), lambda i: (0, 0)),    # fold/broadcast matrix
                    pl.BlockSpec((1, L), lambda i: (0, 0)),    # gamma (lane-tiled)
                    pl.BlockSpec((1, L), lambda i: (0, 0)),    # beta  (lane-tiled)
                ],
                out_specs=pl.BlockSpec((MF, L), lambda i: (0, 0)),
            ),
            compiler_params=pltpu.CompilerParams(
                dimension_semantics=("arbitrary",),
                vmem_limit_bytes=budget),
        )(x2, w_blk, fold_p, gamma_l, beta_l)
    else:
        # ------------------------------ streaming two-pass path ------------------------
        per_row = L * (2 * xb + 2 * ob + 4)            # 2-buf in, 2-buf out, f32 y temp
        t_cap = max(8, ((budget // 2) // per_row) // 8 * 8)
        t = max(8, (min(tile_rows, MF, t_cap) // 8) * 8)
        n_tiles = pl.cdiv(MF, t)
        # Megacore-aware tile count: keep >= 2 (prefer even) tiles on the parallel axis.
        if n_tiles < 2 and MF > 8:
            t = max(8, (((MF + 1) // 2 + 7) // 8) * 8)
            n_tiles = pl.cdiv(MF, t)
        elif n_tiles > 1 and n_tiles % 2 == 1:
            t2 = ((pl.cdiv(MF, n_tiles + 1) + 7) // 8) * 8
            if t2 >= 8:
                t, n_tiles = t2, pl.cdiv(MF, t2)

        cparams = pltpu.CompilerParams(dimension_semantics=("parallel",),
                                       vmem_limit_bytes=budget)

        # Pass 1: tiny (n_tiles, 8, L) per-tile partial sum / sum-of-squares slabs.
        stats = pl.pallas_call(
            functools.partial(_stats_kernel, n_rows=MF, tile=t),
            out_shape=jax.ShapeDtypeStruct((n_tiles, 8, L), f32),
            grid_spec=pltpu.PrefetchScalarGridSpec(
                num_scalar_prefetch=0,
                grid=(n_tiles,),
                in_specs=[
                    pl.BlockSpec((t, L), lambda i: (i, 0)),
                    pl.BlockSpec((L, L), lambda i: (0, 0)),
                ],
                out_specs=pl.BlockSpec((1, 8, L), lambda i: (i, 0, 0)),
            ),
            compiler_params=cparams,
        )(x2, w_blk)

        # Tiny host glue: fold tile / lane-group partials, derive the BN affine.
        s = stats[:, 0, :].sum(axis=0).reshape(F, C).sum(axis=0)    # (C,)
        q = stats[:, 1, :].sum(axis=0).reshape(F, C).sum(axis=0)    # (C,)
        mean0 = s * inv_count
        # TODO(synk): E[y^2]-E[y]^2 loses precision if |mean| >> std; centered sums then.
        var0 = jnp.maximum(q * inv_count - mean0 * mean0, 0.0)      # biased var (BN train)
        scale = gamma.astype(f32) * jax.lax.rsqrt(var0 + EPS)
        shift = beta.astype(f32) - mean0 * scale
        scale_l = jnp.tile(scale, F).reshape(1, L)
        shift_l = jnp.tile(shift, F).reshape(1, L)

        # Pass 2: recompute y and apply the fused conv+BN affine (lane-dense, parallel).
        out = pl.pallas_call(
            _apply_kernel,
            out_shape=jax.ShapeDtypeStruct((MF, L), x.dtype),
            grid_spec=pltpu.PrefetchScalarGridSpec(
                num_scalar_prefetch=0,
                grid=(n_tiles,),
                in_specs=[
                    pl.BlockSpec((t, L), lambda i: (i, 0)),
                    pl.BlockSpec((L, L), lambda i: (0, 0)),
                    pl.BlockSpec((1, L), lambda i: (0, 0)),
                    pl.BlockSpec((1, L), lambda i: (0, 0)),
                ],
                out_specs=pl.BlockSpec((t, L), lambda i: (i, 0)),
            ),
            compiler_params=cparams,
        )(x2, w_blk, scale_l, shift_l)

    out = out.reshape(M_pad, C)
    if M_pad != M:
        out = out[:M]
    return out.reshape(B, N, C)


def reference_forward(x, H, W, weight, bias, gamma, beta):
    """Pure-JAX reference matching PyTorch CB11.forward (BN in train mode)."""
    B, N, C = x.shape
    y = jnp.einsum("bnc,oc->bno", x, weight.reshape(C, C)) + bias.reshape(1, 1, C)
    mean = jnp.mean(y, axis=(0, 1), keepdims=True)
    var = jnp.mean((y - mean) ** 2, axis=(0, 1), keepdims=True)   # biased var
    return (y - mean) * jax.lax.rsqrt(var + EPS) * gamma.reshape(1, 1, C) + beta.reshape(1, 1, C)


if __name__ == "__main__":
    key = jax.random.PRNGKey(0)
    k_x, k_w, k_b, k_x2 = jax.random.split(key, 4)

    dim = 32
    # pwconv.weight: kaiming_normal_(fan_in, relu) -> std = sqrt(2 / fan_in), fan_in = dim
    weight = jax.random.normal(k_w, (dim, dim, 1, 1), dtype=jnp.float32) * jnp.sqrt(2.0 / dim)
    # pwconv.bias: default Conv2d init U(-1/sqrt(fan_in), 1/sqrt(fan_in))
    bound = 1.0 / jnp.sqrt(float(dim))
    bias = jax.random.uniform(k_b, (dim,), minval=-bound, maxval=bound, dtype=jnp.float32)
    # BatchNorm2d affine params (defaults)
    gamma = jnp.ones((dim,), dtype=jnp.float32)
    beta = jnp.zeros((dim,), dtype=jnp.float32)

    # Case 1: B=2, 16x16 spatial -> VMEM-resident single-pass fast path.
    B, H, W = 2, 16, 16
    x = jax.random.normal(k_x, (B, H * W, dim), dtype=jnp.float32)
    out = jax.block_until_ready(cb11_forward(x, H, W, weight, bias, gamma, beta))
    ref = reference_forward(x, H, W, weight, bias, gamma, beta)
    assert out.shape == (B, H * W, dim)
    assert jnp.allclose(out, ref, atol=1e-4, rtol=1e-4), "fast-path mismatch vs reference"

    # Same input through the streaming two-pass path (exercises the tiled kernels).
    out2 = jax.block_until_ready(
        cb11_forward(x, H, W, weight, bias, gamma, beta, force_two_pass=True))
    assert jnp.allclose(out2, ref, atol=1e-4, rtol=1e-4), "two-pass mismatch vs reference"

    # Case 2: 12x12 spatial -> cdiv grid with a masked partial last tile.
    B2, H2, W2 = 2, 12, 12
    x_odd = jax.random.normal(k_x2, (B2, H2 * W2, dim), dtype=jnp.float32)
    out3 = jax.block_until_ready(
        cb11_forward(x_odd, H2, W2, weight, bias, gamma, beta, force_two_pass=True))
    ref3 = reference_forward(x_odd, H2, W2, weight, bias, gamma, beta)
    assert jnp.allclose(out3, ref3, atol=1e-4, rtol=1e-4), "masked-tile mismatch vs reference"

    print("KERNEL_OK")
</pallas_src>

<mosaic_0001>
module attributes {stable_mosaic.version = 11 : i64} {
  func.func @_fused_kernel(%arg0: i32, %arg1: memref<128x128xf32, #tpu.memory_space<vmem>>, %arg2: memref<128x128xf32, #tpu.memory_space<vmem>>, %arg3: memref<128x128xf32, #tpu.memory_space<vmem>>, %arg4: memref<1x128xf32, #tpu.memory_space<vmem>>, %arg5: memref<1x128xf32, #tpu.memory_space<vmem>>, %arg6: memref<128x128xf32, #tpu.memory_space<vmem>>) attributes {dimension_semantics = [#tpu.dimension_semantics<arbitrary>], iteration_bounds = array<i64: 1>, scalar_prefetch = 0 : i64, scratch_operands = 0 : i64, tpu.core_type = #tpu.core_type<tc>, window_params = [{pipeline_mode = #tpu.pipeline_mode<synchronous>, transform_indices = @transform_0, window_bounds = array<i64: 128, 128>}, {pipeline_mode = #tpu.pipeline_mode<synchronous>, transform_indices = @transform_1, window_bounds = array<i64: 128, 128>}, {pipeline_mode = #tpu.pipeline_mode<synchronous>, transform_indices = @transform_2, window_bounds = array<i64: 128, 128>}, {pipeline_mode = #tpu.pipeline_mode<synchronous>, transform_indices = @transform_3, window_bounds = array<i64: 1, 128>}, {pipeline_mode = #tpu.pipeline_mode<synchronous>, transform_indices = @transform_4, window_bounds = array<i64: 1, 128>}, {pipeline_mode = #tpu.pipeline_mode<synchronous>, transform_indices = @transform_5, window_bounds = array<i64: 128, 128>}]} {
    %c0 = arith.constant 0 : index
    %c0_0 = arith.constant 0 : index
    %0 = vector.load %arg1[%c0, %c0_0] : memref<128x128xf32, #tpu.memory_space<vmem>>, vector<128x128xf32>
    %c0_1 = arith.constant 0 : index
    %c0_2 = arith.constant 0 : index
    %1 = vector.load %arg2[%c0_1, %c0_2] : memref<128x128xf32, #tpu.memory_space<vmem>>, vector<128x128xf32>
    %cst = arith.constant dense<0.000000e+00> : vector<128x128xf32>
    %2 = tpu.matmul %0, %1, %cst {dimension_numbers = #tpu.dot_dimension_numbers<[1], [0], [0], [1], [0, 0, 1, 1], [], []>} : vector<128x128xf32>, vector<128x128xf32>, vector<128x128xf32> -> vector<128x128xf32>
    %cst_3 = arith.constant dense<0.000000e+00> : vector<128xf32>
    %3 = vector.multi_reduction <add>, %2, %cst_3 [0] : vector<128x128xf32> to vector<128xf32>
    %4 = vector.shape_cast %3 : vector<128xf32> to vector<1x128xf32>
    %5 = arith.mulf %2, %2 : vector<128x128xf32>
    %cst_4 = arith.constant dense<0.000000e+00> : vector<128xf32>
    %6 = vector.multi_reduction <add>, %5, %cst_4 [0] : vector<128x128xf32> to vector<128xf32>
    %7 = vector.shape_cast %6 : vector<128xf32> to vector<1x128xf32>
    %8 = tpu.iota {dimensions = array<i32: 0>} : vector<8x128xi32>
    %c0_i32 = arith.constant 0 : i32
    %9 = vector.broadcast %c0_i32 : i32 to vector<8x128xi32>
    %10 = arith.cmpi eq, %8, %9 : vector<8x128xi32>
    %11 = vector.shape_cast %4 : vector<1x128xf32> to vector<1x128xf32>
    %12 = vector.broadcast %11 : vector<1x128xf32> to vector<8x128xf32>
    %c1_i32 = arith.constant 1 : i32
    %13 = vector.broadcast %c1_i32 : i32 to vector<8x128xi32>
    %14 = arith.cmpi eq, %8, %13 : vector<8x128xi32>
    %15 = vector.shape_cast %7 : vector<1x128xf32> to vector<1x128xf32>
    %16 = vector.broadcast %15 : vector<1x128xf32> to vector<8x128xf32>
    %cst_5 = arith.constant 0.000000e+00 : f32
    %17 = vector.broadcast %cst_5 : f32 to vector<8x128xf32>
    %18 = arith.select %14, %16, %17 : vector<8x128xi1>, vector<8x128xf32>
    %19 = arith.select %10, %12, %18 : vector<8x128xi1>, vector<8x128xf32>
    %c0_6 = arith.constant 0 : index
    %c0_7 = arith.constant 0 : index
    %20 = vector.load %arg3[%c0_6, %c0_7] : memref<128x128xf32, #tpu.memory_space<vmem>>, vector<128x128xf32>
    %cst_8 = arith.constant dense<0.000000e+00> : vector<8x128xf32>
    %21 = tpu.matmul %19, %20, %cst_8 {dimension_numbers = #tpu.dot_dimension_numbers<[1], [0], [0], [1], [0, 0, 1, 1], [], []>} : vector<8x128xf32>, vector<128x128xf32>, vector<8x128xf32> -> vector<8x128xf32>
    %22 = vector.extract_strided_slice %21 {offsets = [0, 0], sizes = [1, 128], strides = [1, 1]} : vector<8x128xf32> to vector<1x128xf32>
    %cst_9 = arith.constant 0.001953125 : f32
    %23 = vector.broadcast %cst_9 : f32 to vector<1x128xf32>
    %24 = arith.mulf %22, %23 : vector<1x128xf32>
    %25 = vector.extract_strided_slice %21 {offsets = [1, 0], sizes = [1, 128], strides = [1, 1]} : vector<8x128xf32> to vector<1x128xf32>
    %cst_10 = arith.constant 0.001953125 : f32
    %26 = vector.broadcast %cst_10 : f32 to vector<1x128xf32>
    %27 = arith.mulf %25, %26 : vector<1x128xf32>
    %28 = arith.mulf %24, %24 : vector<1x128xf32>
    %29 = arith.subf %27, %28 : vector<1x128xf32>
    %cst_11 = arith.constant 0.000000e+00 : f32
    %30 = vector.broadcast %cst_11 : f32 to vector<1x128xf32>
    %31 = arith.maximumf %29, %30 : vector<1x128xf32>
    %c0_12 = arith.constant 0 : index
    %c0_13 = arith.constant 0 : index
    %32 = vector.load %arg4[%c0_12, %c0_13] : memref<1x128xf32, #tpu.memory_space<vmem>>, vector<1x128xf32>
    %cst_14 = arith.constant 9.99999974E-6 : f32
    %33 = vector.broadcast %cst_14 : f32 to vector<1x128xf32>
    %34 = arith.addf %31, %33 : vector<1x128xf32>
    %35 = math.rsqrt %34 : vector<1x128xf32>
    %36 = arith.mulf %32, %35 : vector<1x128xf32>
    %c0_15 = arith.constant 0 : index
    %c0_16 = arith.constant 0 : index
    %37 = vector.load %arg5[%c0_15, %c0_16] : memref<1x128xf32, #tpu.memory_space<vmem>>, vector<1x128xf32>
    %38 = arith.mulf %24, %36 : vector<1x128xf32>
    %39 = arith.subf %37, %38 : vector<1x128xf32>
    %40 = vector.broadcast %36 : vector<1x128xf32> to vector<128x128xf32>
    %41 = arith.mulf %2, %40 : vector<128x128xf32>
    %42 = vector.broadcast %39 : vector<1x128xf32> to vector<128x128xf32>
    %43 = arith.addf %41, %42 : vector<128x128xf32>
    %c0_17 = arith.constant 0 : index
    %c0_18 = arith.constant 0 : index
    %44 = vector.load %arg6[%c0_17, %c0_18] : memref<128x128xf32, #tpu.memory_space<vmem>>, vector<128x128xf32>
    tpu.vector_store %arg6[%c0_17, %c0_18], %43 {strides = array<i32>} : memref<128x128xf32, #tpu.memory_space<vmem>>, vector<128x128xf32>,
    return
  }
  func.func @transform_0(%arg0: i32) -> (i32, i32) {
    %c0_i32 = arith.constant 0 : i32
    %c0_i32_0 = arith.constant 0 : i32
    %c0_i32_1 = arith.constant 0 : i32
    return %c0_i32, %c0_i32_0 : i32, i32
  }
  func.func @transform_1(%arg0: i32) -> (i32, i32) {
    %c0_i32 = arith.constant 0 : i32
    %c0_i32_0 = arith.constant 0 : i32
    %c0_i32_1 = arith.constant 0 : i32
    return %c0_i32, %c0_i32_0 : i32, i32
  }
  func.func @transform_2(%arg0: i32) -> (i32, i32) {
    %c0_i32 = arith.constant 0 : i32
    %c0_i32_0 = arith.constant 0 : i32
    %c0_i32_1 = arith.constant 0 : i32
    return %c0_i32, %c0_i32_0 : i32, i32
  }
  func.func @transform_3(%arg0: i32) -> (i32, i32) {
    %c0_i32 = arith.constant 0 : i32
    %c0_i32_0 = arith.constant 0 : i32
    %c0_i32_1 = arith.constant 0 : i32
    return %c0_i32, %c0_i32_0 : i32, i32
  }
  func.func @transform_4(%arg0: i32) -> (i32, i32) {
    %c0_i32 = arith.constant 0 : i32
    %c0_i32_0 = arith.constant 0 : i32
    %c0_i32_1 = arith.constant 0 : i32
    return %c0_i32, %c0_i32_0 : i32, i32
  }
  func.func @transform_5(%arg0: i32) -> (i32, i32) {
    %c0_i32 = arith.constant 0 : i32
    %c0_i32_0 = arith.constant 0 : i32
    %c0_i32_1 = arith.constant 0 : i32
    return %c0_i32, %c0_i32_0 : i32, i32
  }
}

</mosaic_0001>

<llo_original>
// kernel: tpu_custom_call.1
$region0: #{tpu_custom_call.1}
  #allocation0 [shape = 'u32[]', space=smem, size = 0x4, offset = 0x4, fixed_abs, tag = 'smem constant byte address 0x4 - core index']
  #allocation1 [shape = 'u32[144,128]{1,0:T(1,128)}', space=vmem, size = 0x12000, scoped, tag = 'internal scratch']
  %s0 = inlined_call_operand.hbm [shape: f32[128,128], index: 0, kind: input, shape index: {}]
  %s1 = inlined_call_operand.hbm [shape: f32[128,128], index: 1, kind: input, shape index: {}]
  %s2 = inlined_call_operand.hbm [shape: f32[128,128], index: 2, kind: input, shape index: {}]
  %s3 = inlined_call_operand.vmem [shape: f32[1,128], index: 3, kind: input, shape index: {}]
  %s4 = inlined_call_operand.vmem [shape: f32[1,128], index: 4, kind: input, shape index: {}]
  %s5 = inlined_call_operand.hbm [shape: f32[128,128], index: 5, kind: output, shape index: {}]
  %s6 = sld [smem:[#allocation0]]
  $region42: #{tpu_custom_call.1} parent=0
    _
  %s8 = ssub.s32 1, %s6
  %s9 = scalar_select 0, %s8, %s6
  $region1: #{tpu_custom_call.1} parent=0
    #allocation2 [shape = 'u8[65536]{0}', space=vmem, size = 0x10000, scoped, tag = 'input window, operand 0, single buffered']
    #allocation3 [shape = 's32[1]{0}', space=sflag, size = 0x4, scoped, tag = 'scoped memory for tpu_custom_call.1']
    #allocation4 [shape = 's32[1]{0}', space=sflag, size = 0x4, scoped, tag = 'scoped memory for tpu_custom_call.1']
    #allocation5 [shape = 'u8[65536]{0}', space=vmem, size = 0x10000, scoped, tag = 'input window, operand 1, single buffered']
    #allocation6 [shape = 's32[1]{0}', space=sflag, size = 0x4, scoped, tag = 'scoped memory for tpu_custom_call.1']
    #allocation7 [shape = 'u8[65536]{0}', space=vmem, size = 0x10000, scoped, tag = 'input window, operand 2, single buffered']
    #allocation8 [shape = 'u8[65536]{0}', space=vmem, size = 0x10000, scoped, tag = 'output window, operand 0, single buffered']
    %10 = vsyncpa [#allocation3], 0
    %11 = vsyncpa [#allocation6], 0
    %12 = vsyncpa [#allocation4], 0
    // Predicated region
    $region2: #{tpu_custom_call.1} parent=1 // pred_check
      _
    $region3: #{tpu_custom_call.1} parent=1 // pred_check_branch
      %14 = sbr.rel (0) target = $region5
    $region4: #{tpu_custom_call.1} parent=1 // pred_region
      %s16 = ssub.s32 2048, 2048
      %17 = vsyncadd [#allocation3], %s16
      %s18 = sshll.u32 [#allocation2], 4
      %s19 = int_to_ptr.vmem [resolvable:$true] %s18
      %24 = dma.hbm_to_vmem [thread:$0]  %s0, 2048, %s19, [#allocation3], 128, 128, 8
    $region5: #{tpu_custom_call.1} parent=1 // pred_fallthru
      _
    // Predicated region
    $region6: #{tpu_custom_call.1} parent=1 // pred_check
      _
    $region7: #{tpu_custom_call.1} parent=1 // pred_check_branch
      %26 = sbr.rel (0) target = $region9
    $region8: #{tpu_custom_call.1} parent=1 // pred_region
      %s28 = ssub.s32 2048, 2048
      %29 = vsyncadd [#allocation6], %s28
      %s30 = sshll.u32 [#allocation5], 4
      %s31 = int_to_ptr.vmem [resolvable:$true] %s30
      %36 = dma.hbm_to_vmem [thread:$0]  %s1, 2048, %s31, [#allocation6], 128, 128, 8
    $region9: #{tpu_custom_call.1} parent=1 // pred_fallthru
      _
    // Predicated region
    $region10: #{tpu_custom_call.1} parent=1 // pred_check
      _
    $region11: #{tpu_custom_call.1} parent=1 // pred_check_branch
      %38 = sbr.rel (0) target = $region13
    $region12: #{tpu_custom_call.1} parent=1 // pred_region
      %s40 = ssub.s32 2048, 2048
      %41 = vsyncadd [#allocation6], %s40
      %s42 = sshll.u32 [#allocation7], 4
      %s43 = int_to_ptr.vmem [resolvable:$true] %s42
      %48 = dma.hbm_to_vmem [thread:$0]  %s2, 2048, %s43, [#allocation6], 128, 128, 8
    $region13: #{tpu_custom_call.1} parent=1 // pred_fallthru
      _
    // Predicated region
    $region14: #{tpu_custom_call.1} parent=1 // pred_check
      _
    $region15: #{tpu_custom_call.1} parent=1 // pred_check_branch
      %50 = sbr.rel (0) target = $region17
    $region16: #{tpu_custom_call.1} parent=1 // pred_region
      _
    $region17: #{tpu_custom_call.1} parent=1 // pred_fallthru
      _
    // Predicated region
    $region18: #{tpu_custom_call.1} parent=1 // pred_check
      _
    $region19: #{tpu_custom_call.1} parent=1 // pred_check_branch
      %52 = sbr.rel (0) target = $region21
    $region20: #{tpu_custom_call.1} parent=1 // pred_region
      _
    $region21: #{tpu_custom_call.1} parent=1 // pred_fallthru
      _
    // Predicated region
    $region22: #{tpu_custom_call.1} parent=1 // pred_check
      _
    $region23: #{tpu_custom_call.1} parent=1 // pred_check_branch
      %54 = sbr.rel (0) target = $region25
    $region24: #{tpu_custom_call.1} parent=1 // pred_region
      %55 = dma.done [#allocation3], 2048
    $region25: #{tpu_custom_call.1} parent=1 // pred_fallthru
      _
    // Predicated region
    $region26: #{tpu_custom_call.1} parent=1 // pred_check
      _
    $region27: #{tpu_custom_call.1} parent=1 // pred_check_branch
      %57 = sbr.rel (0) target = $region29
    $region28: #{tpu_custom_call.1} parent=1 // pred_region
      %58 = dma.done [#allocation6], 2048
    $region29: #{tpu_custom_call.1} parent=1 // pred_fallthru
      _
    // Predicated region
    $region30: #{tpu_custom_call.1} parent=1 // pred_check
      _
    $region31: #{tpu_custom_call.1} parent=1 // pred_check_branch
      %60 = sbr.rel (0) target = $region33
    $region32: #{tpu_custom_call.1} parent=1 // pred_region
      %61 = dma.done [#allocation6], 2048
    $region33: #{tpu_custom_call.1} parent=1 // pred_fallthru
      _
    %v62 = vld [vmem:[#allocation2] sm:$0xff]
    %v63 = vld [vmem:[#allocation2 + $0x8] sm:$0xff]
    %v64 = vld [vmem:[#allocation2 + $0x10] sm:$0xff]
    %v65 = vld [vmem:[#allocation2 + $0x18] sm:$0xff]
    %v66 = vld [vmem:[#allocation2 + $0x20] sm:$0xff]
    %v67 = vld [vmem:[#allocation2 + $0x28] sm:$0xff]
    %v68 = vld [vmem:[#allocation2 + $0x30] sm:$0xff]
    %v69 = vld [vmem:[#allocation2 + $0x38] sm:$0xff]
    %v70 = vld [vmem:[#allocation2 + $0x40] sm:$0xff]
    %v71 = vld [vmem:[#allocation2 + $0x48] sm:$0xff]
    %v72 = vld [vmem:[#allocation2 + $0x50] sm:$0xff]
    %v73 = vld [vmem:[#allocation2 + $0x58] sm:$0xff]
    %v74 = vld [vmem:[#allocation2 + $0x60] sm:$0xff]
    %v75 = vld [vmem:[#allocation2 + $0x68] sm:$0xff]
    %v76 = vld [vmem:[#allocation2 + $0x70] sm:$0xff]
    %v77 = vld [vmem:[#allocation2 + $0x78] sm:$0xff]
    %v78 = vld [vmem:[#allocation5] sm:$0xff]
    %v79 = vld [vmem:[#allocation5 + $0x8] sm:$0xff]
    %v80 = vld [vmem:[#allocation5 + $0x10] sm:$0xff]
    %v81 = vld [vmem:[#allocation5 + $0x18] sm:$0xff]
    %v82 = vld [vmem:[#allocation5 + $0x20] sm:$0xff]
    %v83 = vld [vmem:[#allocation5 + $0x28] sm:$0xff]
    %v84 = vld [vmem:[#allocation5 + $0x30] sm:$0xff]
    %v85 = vld [vmem:[#allocation5 + $0x38] sm:$0xff]
    %v86 = vld [vmem:[#allocation5 + $0x40] sm:$0xff]
    %v87 = vld [vmem:[#allocation5 + $0x48] sm:$0xff]
    %v88 = vld [vmem:[#allocation5 + $0x50] sm:$0xff]
    %v89 = vld [vmem:[#allocation5 + $0x58] sm:$0xff]
    %v90 = vld [vmem:[#allocation5 + $0x60] sm:$0xff]
    %v91 = vld [vmem:[#allocation5 + $0x68] sm:$0xff]
    %v92 = vld [vmem:[#allocation5 + $0x70] sm:$0xff]
    %v93 = vld [vmem:[#allocation5 + $0x78] sm:$0xff]
    %94 = vmatprep.subr.mxu0 0.0
    %95 = vmatpush1.msra.mxu0 %v78
    %96 = vmatprep.subr.mxu0 0.0
    %97 = vmatpush1.msra.mxu0 %v79
    %98 = vmatprep.subr.mxu0 0.0
    %99 = vmatpush1.msra.mxu0 %v80
    %100 = vmatprep.subr.mxu0 0.0
    %101 = vmatpush1.msra.mxu0 %v81
    %102 = vmatprep.subr.mxu0 0.0
    %103 = vmatpush1.msra.mxu0 %v82
    %104 = vmatprep.subr.mxu0 0.0
    %105 = vmatpush1.msra.mxu0 %v83
    %106 = vmatprep.subr.mxu0 0.0
    %107 = vmatpush1.msra.mxu0 %v84
    %108 = vmatprep.subr.mxu0 0.0
    %109 = vmatpush1.msra.mxu0 %v85
    %110 = vmatprep.subr.mxu0 0.0
    %111 = vmatpush1.msra.mxu0 %v86
    %112 = vmatprep.subr.mxu0 0.0
    %113 = vmatpush1.msra.mxu0 %v87
    %114 = vmatprep.subr.mxu0 0.0
    %115 = vmatpush1.msra.mxu0 %v88
    %116 = vmatprep.subr.mxu0 0.0
    %117 = vmatpush1.msra.mxu0 %v89
    %118 = vmatprep.subr.mxu0 0.0
    %119 = vmatpush1.msra.mxu0 %v90
    %120 = vmatprep.subr.mxu0 0.0
    %121 = vmatpush1.msra.mxu0 %v91
    %122 = vmatprep.subr.mxu0 0.0
    %123 = vmatpush1.msra.mxu0 %v92
    %124 = vmatprep.subr.mxu0 0.0
    %125 = vmatpush1.msra.mxu0 %v93
    %126 = vmatprep.subr.mxu0 0.0
    %127 = vmatpush1.msra.mxu0 0.0
    %128 = vmatprep.subr.mxu0 0.0
    %129 = vmatpush1.msra.mxu0 0.0
    %130 = vmatprep.subr.mxu0 0.0
    %131 = vmatpush1.msra.mxu0 0.0
    %132 = vmatprep.subr.mxu0 0.0
    %133 = vmatpush1.msra.mxu0 0.0
    %134 = vmatprep.subr.mxu0 0.0
    %135 = vmatpush1.msra.mxu0 0.0
    %136 = vmatprep.subr.mxu0 0.0
    %137 = vmatpush1.msra.mxu0 0.0
    %138 = vmatprep.subr.mxu0 0.0
    %139 = vmatpush1.msra.mxu0 0.0
    %140 = vmatprep.subr.mxu0 0.0
    %141 = vmatpush1.msra.mxu0 0.0
    %142 = vmatprep.subr.mxu0 0.0
    %143 = vmatpush1.msra.mxu0 0.0
    %144 = vmatprep.subr.mxu0 0.0
    %145 = vmatpush1.msra.mxu0 0.0
    %146 = vmatprep.subr.mxu0 0.0
    %147 = vmatpush1.msra.mxu0 0.0
    %148 = vmatprep.subr.mxu0 0.0
    %149 = vmatpush1.msra.mxu0 0.0
    %150 = vmatprep.subr.mxu0 0.0
    %151 = vmatpush1.msra.mxu0 0.0
    %152 = vmatprep.subr.mxu0 0.0
    %153 = vmatpush1.msra.mxu0 0.0
    %154 = vmatprep.subr.mxu0 0.0
    %155 = vmatpush1.msra.mxu0 0.0
    %156 = vmatprep.subr.mxu0 0.0
    %157 = vmatpush1.msra.mxu0 0.0
    %158 = vmatprep.mubr.f32.mxu0 0.0
    %159 = vmatmul.mubr.f32.gmra.mrb[0].mxu0 %v62
    %v160 = vpop.f32.mrb[0].mxu0
    %v161 = vadd.f32 0.0, %v160
    %v162 = vpop.f32.mrb[0].mxu0
    %163 = vmatprep.mubr.f32.mxu0 0.0
    %164 = vmatmul.mubr.f32.gmra.mrb[0].mxu0 %v63
    %v165 = vpop.f32.mrb[0].mxu0
    %v166 = vadd.f32 0.0, %v165
    %v167 = vpop.f32.mrb[0].mxu0
    %168 = vmatprep.mubr.f32.mxu0 0.0
    %169 = vmatmul.mubr.f32.gmra.mrb[0].mxu0 %v64
    %v170 = vpop.f32.mrb[0].mxu0
    %v171 = vadd.f32 0.0, %v170
    %v172 = vpop.f32.mrb[0].mxu0
    %173 = vmatprep.mubr.f32.mxu0 0.0
    %174 = vmatmul.mubr.f32.gmra.mrb[0].mxu0 %v65
    %v175 = vpop.f32.mrb[0].mxu0
    %v176 = vadd.f32 0.0, %v175
    %v177 = vpop.f32.mrb[0].mxu0
    %178 = vmatprep.mubr.f32.mxu0 0.0
    %179 = vmatmul.mubr.f32.gmra.mrb[0].mxu0 %v66
    %v180 = vpop.f32.mrb[0].mxu0
    %v181 = vadd.f32 0.0, %v180
    %v182 = vpop.f32.mrb[0].mxu0
    %183 = vmatprep.mubr.f32.mxu0 0.0
    %184 = vmatmul.mubr.f32.gmra.mrb[0].mxu0 %v67
    %v185 = vpop.f32.mrb[0].mxu0
    %v186 = vadd.f32 0.0, %v185
    %v187 = vpop.f32.mrb[0].mxu0
    %188 = vmatprep.mubr.f32.mxu0 0.0
    %189 = vmatmul.mubr.f32.gmra.mrb[0].mxu0 %v68
    %v190 = vpop.f32.mrb[0].mxu0
    %v191 = vadd.f32 0.0, %v190
    %v192 = vpop.f32.mrb[0].mxu0
    %193 = vmatprep.mubr.f32.mxu0 0.0
    %194 = vmatmul.mubr.f32.gmra.mrb[0].mxu0 %v69
    %v195 = vpop.f32.mrb[0].mxu0
    %v196 = vadd.f32 0.0, %v195
    %v197 = vpop.f32.mrb[0].mxu0
    %198 = vmatprep.mubr.f32.mxu0 0.0
    %199 = vmatmul.mubr.f32.gmra.mrb[0].mxu0 %v70
    %v200 = vpop.f32.mrb[0].mxu0
    %v201 = vadd.f32 0.0, %v200
    %v202 = vpop.f32.mrb[0].mxu0
    %203 = vmatprep.mubr.f32.mxu0 0.0
    %204 = vmatmul.mubr.f32.gmra.mrb[0].mxu0 %v71
    %v205 = vpop.f32.mrb[0].mxu0
    %v206 = vadd.f32 0.0, %v205
    %v207 = vpop.f32.mrb[0].mxu0
    %208 = vmatprep.mubr.f32.mxu0 0.0
    %209 = vmatmul.mubr.f32.gmra.mrb[0].mxu0 %v72
    %v210 = vpop.f32.mrb[0].mxu0
    %v211 = vadd.f32 0.0, %v210
    %v212 = vpop.f32.mrb[0].mxu0
    %213 = vmatprep.mubr.f32.mxu0 0.0
    %214 = vmatmul.mubr.f32.gmra.mrb[0].mxu0 %v73
    %v215 = vpop.f32.mrb[0].mxu0
    %v216 = vadd.f32 0.0, %v215
    %v217 = vpop.f32.mrb[0].mxu0
    %218 = vmatprep.mubr.f32.mxu0 0.0
    %219 = vmatmul.mubr.f32.gmra.mrb[0].mxu0 %v74
    %v220 = vpop.f32.mrb[0].mxu0
    %v221 = vadd.f32 0.0, %v220
    %v222 = vpop.f32.mrb[0].mxu0
    %223 = vmatprep.mubr.f32.mxu0 0.0
    %224 = vmatmul.mubr.f32.gmra.mrb[0].mxu0 %v75
    %v225 = vpop.f32.mrb[0].mxu0
    %v226 = vadd.f32 0.0, %v225
    %v227 = vpop.f32.mrb[0].mxu0
    %228 = vmatprep.mubr.f32.mxu0 0.0
    %229 = vmatmul.mubr.f32.gmra.mrb[0].mxu0 %v76
    %v230 = vpop.f32.mrb[0].mxu0
    %v231 = vadd.f32 0.0, %v230
    %v232 = vpop.f32.mrb[0].mxu0
    %233 = vmatprep.mubr.f32.mxu0 0.0
    %234 = vmatmul.mubr.f32.gmra.mrb[0].mxu0 %v77
    %v235 = vpop.f32.mrb[0].mxu0
    %v236 = vadd.f32 0.0, %v235
    %v237 = vpop.f32.mrb[0].mxu0
    %238 = vdwg.mxu0
    %v239 = vadd.f32 %v161, %v166
    %v240 = vadd.f32 %v239, %v171
    %v241 = vadd.f32 %v240, %v176
    %v242 = vadd.f32 %v241, %v181
    %v243 = vadd.f32 %v242, %v186
    %v244 = vadd.f32 %v243, %v191
    %v245 = vadd.f32 %v244, %v196
    %v246 = vadd.f32 %v245, %v201
    %v247 = vadd.f32 %v246, %v206
    %v248 = vadd.f32 %v247, %v211
    %v249 = vadd.f32 %v248, %v216
    %v250 = vadd.f32 %v249, %v221
    %v251 = vadd.f32 %v250, %v226
    %v252 = vadd.f32 %v251, %v231
    %v253 = vadd.f32 %v252, %v236
    %v254 = vrot.slane %v253, 4
    %v255 = vadd.f32 %v253, %v254
    %v256 = vrot.slane %v255, 2
    %v257 = vadd.f32 %v255, %v256
    %v258 = vrot.slane %v257, 1
    %v259 = vadd.f32 %v257, %v258
    %v260 = vmul.f32 %v161, %v161
    %v261 = vmul.f32 %v166, %v166
    %v262 = vmul.f32 %v171, %v171
    %v263 = vmul.f32 %v176, %v176
    %v264 = vmul.f32 %v181, %v181
    %v265 = vmul.f32 %v186, %v186
    %v266 = vmul.f32 %v191, %v191
    %v267 = vmul.f32 %v196, %v196
    %v268 = vmul.f32 %v201, %v201
    %v269 = vmul.f32 %v206, %v206
    %v270 = vmul.f32 %v211, %v211
    %v271 = vmul.f32 %v216, %v216
    %v272 = vmul.f32 %v221, %v221
    %v273 = vmul.f32 %v226, %v226
    %v274 = vmul.f32 %v231, %v231
    %v275 = vmul.f32 %v236, %v236
    %v276 = vadd.f32 %v260, %v261
    %v277 = vadd.f32 %v276, %v262
    %v278 = vadd.f32 %v277, %v263
    %v279 = vadd.f32 %v278, %v264
    %v280 = vadd.f32 %v279, %v265
    %v281 = vadd.f32 %v280, %v266
    %v282 = vadd.f32 %v281, %v267
    %v283 = vadd.f32 %v282, %v268
    %v284 = vadd.f32 %v283, %v269
    %v285 = vadd.f32 %v284, %v270
    %v286 = vadd.f32 %v285, %v271
    %v287 = vadd.f32 %v286, %v272
    %v288 = vadd.f32 %v287, %v273
    %v289 = vadd.f32 %v288, %v274
    %v290 = vadd.f32 %v289, %v275
    %v291 = vrot.slane %v290, 4
    %v292 = vadd.f32 %v290, %v291
    %v293 = vrot.slane %v292, 2
    %v294 = vadd.f32 %v292, %v293
    %v295 = vrot.slane %v294, 1
    %v296 = vadd.f32 %v294, %v295
    %v297 = vlaneseq
    %v298 = vshrl.u32 %v297, 7
    %vm299 = vcmp.eq.s32.totalorder %v298, 0
    %vm300 = vcmp.eq.s32.totalorder %v298, 1
    %v301 = vsel %vm300, %v296, 0.0
    %v302 = vsel %vm299, %v259, %v301
    %v303 = vld [vmem:[#allocation7] sm:$0xff]
    %v304 = vld [vmem:[#allocation7 + $0x8] sm:$0xff]
    %v305 = vld [vmem:[#allocation7 + $0x10] sm:$0xff]
    %v306 = vld [vmem:[#allocation7 + $0x18] sm:$0xff]
    %v307 = vld [vmem:[#allocation7 + $0x20] sm:$0xff]
    %v308 = vld [vmem:[#allocation7 + $0x28] sm:$0xff]
    %v309 = vld [vmem:[#allocation7 + $0x30] sm:$0xff]
    %v310 = vld [vmem:[#allocation7 + $0x38] sm:$0xff]
    %v311 = vld [vmem:[#allocation7 + $0x40] sm:$0xff]
    %v312 = vld [vmem:[#allocation7 + $0x48] sm:$0xff]
    %v313 = vld [vmem:[#allocation7 + $0x50] sm:$0xff]
    %v314 = vld [vmem:[#allocation7 + $0x58] sm:$0xff]
    %v315 = vld [vmem:[#allocation7 + $0x60] sm:$0xff]
    %v316 = vld [vmem:[#allocation7 + $0x68] sm:$0xff]
    %v317 = vld [vmem:[#allocation7 + $0x70] sm:$0xff]
    %v318 = vld [vmem:[#allocation7 + $0x78] sm:$0xff]
    %319 = vmatprep.subr.mxu0 0.0
    %320 = vmatpush1.msra.mxu0 %v303
    %321 = vmatprep.subr.mxu0 0.0
    %322 = vmatpush1.msra.mxu0 %v304
    %323 = vmatprep.subr.mxu0 0.0
    %324 = vmatpush1.msra.mxu0 %v305
    %325 = vmatprep.subr.mxu0 0.0
    %326 = vmatpush1.msra.mxu0 %v306
    %327 = vmatprep.subr.mxu0 0.0
    %328 = vmatpush1.msra.mxu0 %v307
    %329 = vmatprep.subr.mxu0 0.0
    %330 = vmatpush1.msra.mxu0 %v308
    %331 = vmatprep.subr.mxu0 0.0
    %332 = vmatpush1.msra.mxu0 %v309
    %333 = vmatprep.subr.mxu0 0.0
    %334 = vmatpush1.msra.mxu0 %v310
    %335 = vmatprep.subr.mxu0 0.0
    %336 = vmatpush1.msra.mxu0 %v311
    %337 = vmatprep.subr.mxu0 0.0
    %338 = vmatpush1.msra.mxu0 %v312
    %339 = vmatprep.subr.mxu0 0.0
    %340 = vmatpush1.msra.mxu0 %v313
    %341 = vmatprep.subr.mxu0 0.0
    %342 = vmatpush1.msra.mxu0 %v314
    %343 = vmatprep.subr.mxu0 0.0
    %344 = vmatpush1.msra.mxu0 %v315
    %345 = vmatprep.subr.mxu0 0.0
    %346 = vmatpush1.msra.mxu0 %v316
    %347 = vmatprep.subr.mxu0 0.0
    %348 = vmatpush1.msra.mxu0 %v317
    %349 = vmatprep.subr.mxu0 0.0
    %350 = vmatpush1.msra.mxu0 %v318
    %351 = vmatprep.subr.mxu0 0.0
    %352 = vmatpush1.msra.mxu0 0.0
    %353 = vmatprep.subr.mxu0 0.0
    %354 = vmatpush1.msra.mxu0 0.0
    %355 = vmatprep.subr.mxu0 0.0
    %356 = vmatpush1.msra.mxu0 0.0
    %357 = vmatprep.subr.mxu0 0.0
    %358 = vmatpush1.msra.mxu0 0.0
    %359 = vmatprep.subr.mxu0 0.0
    %360 = vmatpush1.msra.mxu0 0.0
    %361 = vmatprep.subr.mxu0 0.0
    %362 = vmatpush1.msra.mxu0 0.0
    %363 = vmatprep.subr.mxu0 0.0
    %364 = vmatpush1.msra.mxu0 0.0
    %365 = vmatprep.subr.mxu0 0.0
    %366 = vmatpush1.msra.mxu0 0.0
    %367 = vmatprep.subr.mxu0 0.0
    %368 = vmatpush1.msra.mxu0 0.0
    %369 = vmatprep.subr.mxu0 0.0
    %370 = vmatpush1.msra.mxu0 0.0
    %371 = vmatprep.subr.mxu0 0.0
    %372 = vmatpush1.msra.mxu0 0.0
    %373 = vmatprep.subr.mxu0 0.0
    %374 = vmatpush1.msra.mxu0 0.0
    %375 = vmatprep.subr.mxu0 0.0
    %376 = vmatpush1.msra.mxu0 0.0
    %377 = vmatprep.subr.mxu0 0.0
    %378 = vmatpush1.msra.mxu0 0.0
    %379 = vmatprep.subr.mxu0 0.0
    %380 = vmatpush1.msra.mxu0 0.0
    %381 = vmatprep.subr.mxu0 0.0
    %382 = vmatpush1.msra.mxu0 0.0
    %383 = vmatprep.mubr.f32.mxu0 0.0
    %384 = vmatmul.mubr.f32.gmra.mrb[0].mxu0 %v302
    %v385 = vpop.f32.mrb[0].mxu0
    %v386 = vadd.f32 0.0, %v385
    %v387 = vpop.f32.mrb[0].mxu0
    %388 = vdwg.mxu0
    %v389 = vmul.f32 %v386, 0.001953125
    %v390 = vmul.f32 %v389, %v389
    %v392 = vrot.slane %v390, 7
    %v394 = vsub.f32 %v389, %v392
    %v395 = vmax.f32 %v394, 0.0
    %v396 = vld [vmem:[%s3] sm:$0x1]
    %v397 = vadd.f32 %v395, 1e-05
    %v398 = vrsqrt.pop %v397
    %v401 = vunpack.c.l.s4 1966171168
    %v402 = vunpack.c.0.s8 %v401
    %v403 = vlaneseq
    %v404 = vshrl.u32 %v403, 7
    %v405 = vsub.s32 %v402, %v404
    %v406 = vrot.slane %v398, %v405
    %v407 = vcombine.high %v406, %v406
    %v409 = vunpack.c.l.s4 1966171168
    %v410 = vunpack.c.0.s8 %v409
    %v411 = vlaneseq
    %v412 = vshrl.u32 %v411, 7
    %v413 = vsub.s32 %v410, %v412
    %v414 = vrot.slane %v407, %v413
    %v416 = vmul.f32 %v396, %v414
    %v417 = vld [vmem:[%s4] sm:$0x1]
    %v418 = vmul.f32 %v389, %v416
    %v419 = vsub.f32 %v417, %v418
    %v421 = vlaneseq
    %v422 = vshrl.u32 %v421, 7
    %v423 = vsub.s32 0, %v422
    %v424 = vrot.slane %v416, %v423
    %v426 = vmul.f32 %v161, %v424
    %v427 = vmul.f32 %v166, %v424
    %v428 = vmul.f32 %v171, %v424
    %v429 = vmul.f32 %v176, %v424
    %v430 = vmul.f32 %v181, %v424
    %v431 = vmul.f32 %v186, %v424
    %v432 = vmul.f32 %v191, %v424
    %v433 = vmul.f32 %v196, %v424
    %v434 = vmul.f32 %v201, %v424
    %v435 = vmul.f32 %v206, %v424
    %v436 = vmul.f32 %v211, %v424
    %v437 = vmul.f32 %v216, %v424
    %v438 = vmul.f32 %v221, %v424
    %v439 = vmul.f32 %v226, %v424
    %v440 = vmul.f32 %v231, %v424
    %v441 = vmul.f32 %v236, %v424
    %v443 = vlaneseq
    %v444 = vshrl.u32 %v443, 7
    %v445 = vsub.s32 0, %v444
    %v446 = vrot.slane %v419, %v445
    %v448 = vadd.f32 %v426, %v446
    %v449 = vadd.f32 %v427, %v446
    %v450 = vadd.f32 %v428, %v446
    %v451 = vadd.f32 %v429, %v446
    %v452 = vadd.f32 %v430, %v446
    %v453 = vadd.f32 %v431, %v446
    %v454 = vadd.f32 %v432, %v446
    %v455 = vadd.f32 %v433, %v446
    %v456 = vadd.f32 %v434, %v446
    %v457 = vadd.f32 %v435, %v446
    %v458 = vadd.f32 %v436, %v446
    %v459 = vadd.f32 %v437, %v446
    %v460 = vadd.f32 %v438, %v446
    %v461 = vadd.f32 %v439, %v446
    %v462 = vadd.f32 %v440, %v446
    %v463 = vadd.f32 %v441, %v446
    %464 = vst [vmem:[#allocation8] sm:$0xff] %v448
    %465 = vst [vmem:[#allocation8 + $0x8] sm:$0xff] %v449
    %466 = vst [vmem:[#allocation8 + $0x10] sm:$0xff] %v450
    %467 = vst [vmem:[#allocation8 + $0x18] sm:$0xff] %v451
    %468 = vst [vmem:[#allocation8 + $0x20] sm:$0xff] %v452
    %469 = vst [vmem:[#allocation8 + $0x28] sm:$0xff] %v453
    %470 = vst [vmem:[#allocation8 + $0x30] sm:$0xff] %v454
    %471 = vst [vmem:[#allocation8 + $0x38] sm:$0xff] %v455
    %472 = vst [vmem:[#allocation8 + $0x40] sm:$0xff] %v456
    %473 = vst [vmem:[#allocation8 + $0x48] sm:$0xff] %v457
    %474 = vst [vmem:[#allocation8 + $0x50] sm:$0xff] %v458
    %475 = vst [vmem:[#allocation8 + $0x58] sm:$0xff] %v459
    %476 = vst [vmem:[#allocation8 + $0x60] sm:$0xff] %v460
    %477 = vst [vmem:[#allocation8 + $0x68] sm:$0xff] %v461
    %478 = vst [vmem:[#allocation8 + $0x70] sm:$0xff] %v462
    %479 = vst [vmem:[#allocation8 + $0x78] sm:$0xff] %v463
    // Predicated region
    $region34: #{tpu_custom_call.1} parent=1 // pred_check
      _
    $region35: #{tpu_custom_call.1} parent=1 // pred_check_branch
      %481 = sbr.rel (0) target = $region37
    $region36: #{tpu_custom_call.1} parent=1 // pred_region
      %s483 = ssub.s32 2048, 2048
      %484 = vsyncadd [#allocation4], %s483
      %s485 = sshll.u32 [#allocation8], 4
      %s486 = int_to_ptr.vmem [resolvable:$true] %s485
      %491 = dma.vmem_to_hbm [thread:$0]  %s486, 2048, %s5, [#allocation4], 128, 128, 8
    $region37: #{tpu_custom_call.1} parent=1 // pred_fallthru
      _
    // Predicated region
    $region38: #{tpu_custom_call.1} parent=1 // pred_check
      _
    $region39: #{tpu_custom_call.1} parent=1 // pred_check_branch
      %493 = sbr.rel (0) target = $region41
    $region40: #{tpu_custom_call.1} parent=1 // pred_region
      %494 = dma.done [#allocation4], 2048
    $region41: #{tpu_custom_call.1} parent=1 // pred_fallthru
      _
    %495 = vsyncpa [#allocation3], 1
    %496 = vsyncpa [#allocation6], 1
    %497 = vsyncpa [#allocation4], 1

</llo_original>
